<compile_context>
chip_gen: v7x
topology: tpu7x:2x2x1
jax: 0.10.0
libtpu: 0.0.40
codegen_flags: <defaults>
</compile_context>

<pallas_src>
import jax
import jax.numpy as jnp
from jax.experimental import pallas as pl
from jax.experimental.pallas import tpu as pltpu


def _csa_kernel(csa_ref, vit_ref, w1_ref, b1_ref, w2_ref, b2_ref,
                csa2_ref, vit2_ref):
    # conv1 (1x1, BN1 folded) on the MXU with f32 accumulation.
    y1 = jnp.dot(csa_ref[...].astype(w1_ref.dtype), w1_ref[...],
                 preferred_element_type=jnp.float32)
    y1 = jnp.maximum(y1 + b1_ref[...], 0.0)
    # residual add -- f32 elementwise path (safe on v5e: no bf16 VPU).
    v2 = vit_ref[...].astype(jnp.float32) + y1
    vit2_ref[...] = v2.astype(vit2_ref.dtype)
    # conv2 (1x1, BN2 folded) + ReLU.
    y2 = jnp.dot(v2.astype(w2_ref.dtype), w2_ref[...],
                 preferred_element_type=jnp.float32)
    csa2_ref[...] = jnp.maximum(y2 + b2_ref[...], 0.0).astype(csa2_ref.dtype)


def _pick_pack_factor(rows, max_c):
    # Pack P pixels into the lane dimension.  P must divide the pixel count;
    # cap the packed width so the block-diagonal FLOP waste stays bounded.
    for p in (16, 8, 4, 2):
        if rows % p == 0 and max_c * p <= 1024:
            return p
    return 1


def _pick_row_tile(packed_rows, target):
    # Largest divisor of packed_rows that is <= target and a multiple of 8
    # (sublane-aligned), so the grid divides exactly: no padding, no partial
    # blocks, no extra HBM copies.
    target = int(max(8, min(target, packed_rows)))
    if target >= packed_rows:
        return packed_rows
    for d in range(target - target % 8, 7, -8):
        if packed_rows % d == 0:
            return d
    # Pathological (e.g. prime) pixel counts: fall back to a single full block.
    return packed_rows


def convolutional_side_adapter(csa1, vit1, params, *, block_bytes=4 << 20,
                               mxu_dtype=jnp.bfloat16, eps=1e-5):
    """csa1: (N,H,W,Cin), vit1: (N,H,W,C1) -> (csa2: (N,H,W,C2), vit2: (N,H,W,C1))."""
    (w1, b1, g1, beta1, mean1, var1,
     w2, b2, g2, beta2, mean2, var2) = params

    N, H, W, Cin = csa1.shape
    C1 = w1.shape[1]
    C2 = w2.shape[1]
    assert vit1.shape == (N, H, W, C1)

    # Fold eval-mode BN into the conv weights/biases (host side, tiny tensors):
    #   bn(conv(x)) = x @ (W*s) + (b*s + beta - mean*s),  s = g/sqrt(var+eps)
    s1 = g1 / jnp.sqrt(var1 + eps)
    w1f = w1.astype(jnp.float32) * s1[None, :]
    b1f = (b1 * s1 + beta1 - mean1 * s1).reshape(1, C1).astype(jnp.float32)
    s2 = g2 / jnp.sqrt(var2 + eps)
    w2f = w2.astype(jnp.float32) * s2[None, :]
    b2f = (b2 * s2 + beta2 - mean2 * s2).reshape(1, C2).astype(jnp.float32)

    # Residual add promotes; conv2 output follows it (matches PyTorch promotion).
    out_dtype = jnp.promote_types(csa1.dtype, vit1.dtype)

    # Lane-dense pixel packing: P pixels per packed row, channels innermost, so
    # the reshapes are contiguous (HBM layout unchanged -- no extra pass).
    rows = N * H * W
    P = _pick_pack_factor(rows, max(Cin, C1, C2))
    packed_rows = rows // P
    wi, wm, wo = Cin * P, C1 * P, C2 * P
    x = csa1.reshape(packed_rows, wi)
    v = vit1.reshape(packed_rows, wm)

    # Block-diagonal folded weights (P copies on the diagonal) + tiled biases:
    #   W_bd[p*Cin+c, p*Cout+d] = W[c, d]
    eye_p = jnp.eye(P, dtype=jnp.float32)
    w1_bd = jnp.kron(eye_p, w1f).astype(mxu_dtype)
    w2_bd = jnp.kron(eye_p, w2f).astype(mxu_dtype)
    b1_bd = jnp.tile(b1f, (1, P))
    b2_bd = jnp.tile(b2f, (1, P))

    # Row tile from a streamed-bytes budget; always an exact divisor of the
    # packed row count, capped so >=2 blocks exist for megacore sharding.
    osize = jnp.dtype(out_dtype).itemsize
    bpr = (wi * csa1.dtype.itemsize + wm * vit1.dtype.itemsize
           + wm * osize + wo * osize)              # streamed bytes / packed row
    target_rt = max(8, block_bytes // bpr)
    if packed_rows >= 16:
        target_rt = min(target_rt, packed_rows // 2)
    rt = _pick_row_tile(packed_rows, target_rt)
    n_blocks = packed_rows // rt

    wbytes = (w1_bd.size * w1_bd.dtype.itemsize
              + w2_bd.size * w2_bd.dtype.itemsize
              + (b1_bd.size + b2_bd.size) * 4)
    vmem_need = 2 * rt * bpr + 2 * wbytes + (2 << 20)   # double-buffered blocks
    vmem_limit = int(min(max(vmem_need, 16 << 20), 48 << 20))

    cost = pl.CostEstimate(
        flops=int(2 * packed_rows * (wi * wm + wm * wo)),
        transcendentals=0,
        bytes_accessed=int(packed_rows * bpr + wbytes))

    row_map = lambda i: (i, 0)
    full_map = lambda i: (0, 0)

    csa2_p, vit2_p = pl.pallas_call(
        _csa_kernel,
        out_shape=(jax.ShapeDtypeStruct((packed_rows, wo), out_dtype),
                   jax.ShapeDtypeStruct((packed_rows, wm), out_dtype)),
        grid_spec=pltpu.PrefetchScalarGridSpec(
            num_scalar_prefetch=0,
            grid=(n_blocks,),
            in_specs=[
                pl.BlockSpec((rt, wi), row_map),    # packed csa1 rows
                pl.BlockSpec((rt, wm), row_map),    # packed vit1 rows
                pl.BlockSpec((wi, wm), full_map),   # block-diag folded W1
                pl.BlockSpec((1, wm), full_map),    # tiled folded b1
                pl.BlockSpec((wm, wo), full_map),   # block-diag folded W2
                pl.BlockSpec((1, wo), full_map),    # tiled folded b2
            ],
            out_specs=[
                pl.BlockSpec((rt, wo), row_map),    # packed csa2
                pl.BlockSpec((rt, wm), row_map),    # packed vit2
            ],
        ),
        compiler_params=pltpu.CompilerParams(
            dimension_semantics=("parallel",),
            vmem_limit_bytes=vmem_limit),
        cost_estimate=cost,
    )(x, v, w1_bd, b1_bd, w2_bd, b2_bd)

    # Free (contiguous) un-packing reshapes.
    return csa2_p.reshape(N, H, W, C2), vit2_p.reshape(N, H, W, C1)


def _init_params(key, cin, c1, c2):
    ks = jax.random.split(key, 8)
    # conv weights stored as (in, out) matrices (PyTorch (out,in,1,1) squeezed+T)
    w1 = jax.random.normal(ks[0], (cin, c1), jnp.float32) * 0.1
    b1 = jax.random.normal(ks[1], (c1,), jnp.float32) * 0.1
    w2 = jax.random.normal(ks[2], (c1, c2), jnp.float32) * 0.1
    b2 = jax.random.normal(ks[3], (c2,), jnp.float32) * 0.1
    # BN params / running stats (non-trivial, deterministic)
    g1 = 1.0 + 0.1 * jax.random.normal(ks[4], (c1,), jnp.float32)
    beta1 = 0.1 * jax.random.normal(ks[5], (c1,), jnp.float32)
    mean1 = 0.05 * jnp.arange(c1, dtype=jnp.float32)
    var1 = 1.0 + 0.02 * jnp.arange(c1, dtype=jnp.float32)
    g2 = 1.0 + 0.1 * jax.random.normal(ks[6], (c2,), jnp.float32)
    beta2 = 0.1 * jax.random.normal(ks[7], (c2,), jnp.float32)
    mean2 = 0.03 * jnp.arange(c2, dtype=jnp.float32)
    var2 = 1.0 + 0.01 * jnp.arange(c2, dtype=jnp.float32)
    return (w1, b1, g1, beta1, mean1, var1,
            w2, b2, g2, beta2, mean2, var2)


def _reference(csa1, vit1, params):
    (w1, b1, g1, beta1, mean1, var1,
     w2, b2, g2, beta2, mean2, var2) = params
    eps = 1e-5
    y1 = jnp.einsum("nhwc,cd->nhwd", csa1, w1) + b1
    y1 = (y1 - mean1) / jnp.sqrt(var1 + eps) * g1 + beta1
    y1 = jnp.maximum(y1, 0.0)
    vit2 = vit1 + y1
    y2 = jnp.einsum("nhwc,cd->nhwd", vit2, w2) + b2
    y2 = (y2 - mean2) / jnp.sqrt(var2 + eps) * g2 + beta2
    csa2 = jnp.maximum(y2, 0.0)
    return csa2, vit2


if __name__ == "__main__":
    key = jax.random.PRNGKey(0)
    k_csa, k_vit, k_par = jax.random.split(key, 3)

    N, H, W = 2, 16, 16
    in_channels1, out_channels1, out_channels2 = 8, 16, 32

    csa1 = jax.random.normal(k_csa, (N, H, W, in_channels1), jnp.float32)
    vit1 = jax.random.normal(k_vit, (N, H, W, out_channels1), jnp.float32)
    params = _init_params(k_par, in_channels1, out_channels1, out_channels2)

    # Default (perf) path: bf16 MXU operands, f32 elementwise path.
    csa2, vit2 = convolutional_side_adapter(csa1, vit1, params)
    # Full-f32 matmul path for a tight numerical check.
    csa2_f32, vit2_f32 = convolutional_side_adapter(
        csa1, vit1, params, mxu_dtype=jnp.float32)
    jax.block_until_ready((csa2, vit2, csa2_f32, vit2_f32))

    csa2_ref, vit2_ref = _reference(csa1, vit1, params)
    assert csa2.dtype == jnp.float32 and vit2.dtype == jnp.float32
    assert jnp.allclose(csa2_f32, csa2_ref, atol=1e-4, rtol=1e-4)
    assert jnp.allclose(vit2_f32, vit2_ref, atol=1e-4, rtol=1e-4)
    assert jnp.allclose(csa2, csa2_ref, atol=3e-2, rtol=3e-2)
    assert jnp.allclose(vit2, vit2_ref, atol=3e-2, rtol=3e-2)

    print("KERNEL_OK")
</pallas_src>

<mosaic_0001>
module attributes {stable_mosaic.version = 11 : i64} {
  func.func @_csa_kernel(%arg0: i32, %arg1: memref<16x128xf32, #tpu.memory_space<vmem>>, %arg2: memref<16x256xf32, #tpu.memory_space<vmem>>, %arg3: memref<128x256xbf16, #tpu.memory_space<vmem>>, %arg4: memref<1x256xf32, #tpu.memory_space<vmem>>, %arg5: memref<256x512xbf16, #tpu.memory_space<vmem>>, %arg6: memref<1x512xf32, #tpu.memory_space<vmem>>, %arg7: memref<16x512xf32, #tpu.memory_space<vmem>>, %arg8: memref<16x256xf32, #tpu.memory_space<vmem>>) attributes {dimension_semantics = [#tpu.dimension_semantics<parallel>], iteration_bounds = array<i64: 2>, scalar_prefetch = 0 : i64, scratch_operands = 0 : i64, tpu.core_type = #tpu.core_type<tc>, window_params = [{transform_indices = @transform_0, window_bounds = array<i64: 16, 128>}, {transform_indices = @transform_1, window_bounds = array<i64: 16, 256>}, {pipeline_mode = #tpu.pipeline_mode<synchronous>, transform_indices = @transform_2, window_bounds = array<i64: 128, 256>}, {pipeline_mode = #tpu.pipeline_mode<synchronous>, transform_indices = @transform_3, window_bounds = array<i64: 1, 256>}, {pipeline_mode = #tpu.pipeline_mode<synchronous>, transform_indices = @transform_4, window_bounds = array<i64: 256, 512>}, {pipeline_mode = #tpu.pipeline_mode<synchronous>, transform_indices = @transform_5, window_bounds = array<i64: 1, 512>}, {transform_indices = @transform_6, window_bounds = array<i64: 16, 512>}, {transform_indices = @transform_7, window_bounds = array<i64: 16, 256>}]} {
    %c0 = arith.constant 0 : index
    %c0_0 = arith.constant 0 : index
    %0 = vector.load %arg1[%c0, %c0_0] : memref<16x128xf32, #tpu.memory_space<vmem>>, vector<16x128xf32>
    %1 = arith.truncf %0 : vector<16x128xf32> to vector<16x128xbf16>
    %c0_1 = arith.constant 0 : index
    %c0_2 = arith.constant 0 : index
    %2 = vector.load %arg3[%c0_1, %c0_2] : memref<128x256xbf16, #tpu.memory_space<vmem>>, vector<128x256xbf16>
    %cst = arith.constant dense<0.000000e+00> : vector<16x256xf32>
    %3 = tpu.matmul %1, %2, %cst {dimension_numbers = #tpu.dot_dimension_numbers<[1], [0], [0], [1], [0, 0, 1, 1], [], []>} : vector<16x128xbf16>, vector<128x256xbf16>, vector<16x256xf32> -> vector<16x256xf32>
    %c0_3 = arith.constant 0 : index
    %c0_4 = arith.constant 0 : index
    %4 = vector.load %arg4[%c0_3, %c0_4] : memref<1x256xf32, #tpu.memory_space<vmem>>, vector<1x256xf32>
    %5 = vector.broadcast %4 : vector<1x256xf32> to vector<16x256xf32>
    %6 = arith.addf %3, %5 : vector<16x256xf32>
    %cst_5 = arith.constant 0.000000e+00 : f32
    %7 = vector.broadcast %cst_5 : f32 to vector<16x256xf32>
    %8 = arith.maximumf %6, %7 : vector<16x256xf32>
    %c0_6 = arith.constant 0 : index
    %c0_7 = arith.constant 0 : index
    %9 = vector.load %arg2[%c0_6, %c0_7] : memref<16x256xf32, #tpu.memory_space<vmem>>, vector<16x256xf32>
    %10 = arith.addf %9, %8 : vector<16x256xf32>
    %c0_8 = arith.constant 0 : index
    %c0_9 = arith.constant 0 : index
    %11 = vector.load %arg8[%c0_8, %c0_9] : memref<16x256xf32, #tpu.memory_space<vmem>>, vector<16x256xf32>
    tpu.vector_store %arg8[%c0_8, %c0_9], %10 {strides = array<i32>} : memref<16x256xf32, #tpu.memory_space<vmem>>, vector<16x256xf32>,
    %12 = arith.truncf %10 : vector<16x256xf32> to vector<16x256xbf16>
    %c0_10 = arith.constant 0 : index
    %c0_11 = arith.constant 0 : index
    %13 = vector.load %arg5[%c0_10, %c0_11] : memref<256x512xbf16, #tpu.memory_space<vmem>>, vector<256x512xbf16>
    %cst_12 = arith.constant dense<0.000000e+00> : vector<16x512xf32>
    %14 = tpu.matmul %12, %13, %cst_12 {dimension_numbers = #tpu.dot_dimension_numbers<[1], [0], [0], [1], [0, 0, 1, 1], [], []>} : vector<16x256xbf16>, vector<256x512xbf16>, vector<16x512xf32> -> vector<16x512xf32>
    %c0_13 = arith.constant 0 : index
    %c0_14 = arith.constant 0 : index
    %15 = vector.load %arg6[%c0_13, %c0_14] : memref<1x512xf32, #tpu.memory_space<vmem>>, vector<1x512xf32>
    %16 = vector.broadcast %15 : vector<1x512xf32> to vector<16x512xf32>
    %17 = arith.addf %14, %16 : vector<16x512xf32>
    %cst_15 = arith.constant 0.000000e+00 : f32
    %18 = vector.broadcast %cst_15 : f32 to vector<16x512xf32>
    %19 = arith.maximumf %17, %18 : vector<16x512xf32>
    %c0_16 = arith.constant 0 : index
    %c0_17 = arith.constant 0 : index
    %20 = vector.load %arg7[%c0_16, %c0_17] : memref<16x512xf32, #tpu.memory_space<vmem>>, vector<16x512xf32>
    tpu.vector_store %arg7[%c0_16, %c0_17], %19 {strides = array<i32>} : memref<16x512xf32, #tpu.memory_space<vmem>>, vector<16x512xf32>,
    return
  }
  func.func @transform_0(%arg0: i32) -> (i32, i32) {
    %c0_i32 = arith.constant 0 : i32
    %c0_i32_0 = arith.constant 0 : i32
    return %arg0, %c0_i32 : i32, i32
  }
  func.func @transform_1(%arg0: i32) -> (i32, i32) {
    %c0_i32 = arith.constant 0 : i32
    %c0_i32_0 = arith.constant 0 : i32
    return %arg0, %c0_i32 : i32, i32
  }
  func.func @transform_2(%arg0: i32) -> (i32, i32) {
    %c0_i32 = arith.constant 0 : i32
    %c0_i32_0 = arith.constant 0 : i32
    %c0_i32_1 = arith.constant 0 : i32
    return %c0_i32, %c0_i32_0 : i32, i32
  }
  func.func @transform_3(%arg0: i32) -> (i32, i32) {
    %c0_i32 = arith.constant 0 : i32
    %c0_i32_0 = arith.constant 0 : i32
    %c0_i32_1 = arith.constant 0 : i32
    return %c0_i32, %c0_i32_0 : i32, i32
  }
  func.func @transform_4(%arg0: i32) -> (i32, i32) {
    %c0_i32 = arith.constant 0 : i32
    %c0_i32_0 = arith.constant 0 : i32
    %c0_i32_1 = arith.constant 0 : i32
    return %c0_i32, %c0_i32_0 : i32, i32
  }
  func.func @transform_5(%arg0: i32) -> (i32, i32) {
    %c0_i32 = arith.constant 0 : i32
    %c0_i32_0 = arith.constant 0 : i32
    %c0_i32_1 = arith.constant 0 : i32
    return %c0_i32, %c0_i32_0 : i32, i32
  }
  func.func @transform_6(%arg0: i32) -> (i32, i32) {
    %c0_i32 = arith.constant 0 : i32
    %c0_i32_0 = arith.constant 0 : i32
    return %arg0, %c0_i32 : i32, i32
  }
  func.func @transform_7(%arg0: i32) -> (i32, i32) {
    %c0_i32 = arith.constant 0 : i32
    %c0_i32_0 = arith.constant 0 : i32
    return %arg0, %c0_i32 : i32, i32
  }
}

</mosaic_0001>

<llo_original>
// kernel: tpu_custom_call.1
$region0: #{tpu_custom_call.1}
  #allocation0 [shape = 'u32[]', space=smem, size = 0x4, offset = 0x4, fixed_abs, tag = 'smem constant byte address 0x4 - core index']
  #allocation1 [shape = 'u32[144,128]{1,0:T(1,128)}', space=vmem, size = 0x12000, scoped, tag = 'internal scratch']
  %s0 = inlined_call_operand.hbm [shape: f32[32,128], index: 0, kind: input, shape index: {}]
  %s1 = inlined_call_operand.hbm [shape: f32[32,256], index: 1, kind: input, shape index: {}]
  %s2 = inlined_call_operand.hbm [shape: bf16[128,256], index: 2, kind: input, shape index: {}]
  %s3 = inlined_call_operand.vmem [shape: f32[1,256], index: 3, kind: input, shape index: {}]
  %s4 = inlined_call_operand.hbm [shape: bf16[256,512], index: 4, kind: input, shape index: {}]
  %s5 = inlined_call_operand.vmem [shape: f32[1,512], index: 5, kind: input, shape index: {}]
  %s6 = inlined_call_operand.hbm [shape: f32[32,512], index: 6, kind: output, shape index: {0}]
  %s7 = inlined_call_operand.hbm [shape: f32[32,256], index: 7, kind: output, shape index: {1}]
  %8 = xla_tuple %s6, %s7
  %s9 = sld [smem:[#allocation0]]
  $region81: #{tpu_custom_call.1} parent=0
    _
  %s11 = ssub.s32 1, %s9
  %s12 = scalar_select 0, %s11, %s9
  $region1: #{tpu_custom_call.1} parent=0
    #allocation2 [shape = 'u8[16384]{0}', space=vmem, size = 0x4000, scoped, tag = 'input window, operand 0']
    #allocation3 [shape = 's32[2]{0}', space=sflag, size = 0x8, scoped, tag = 'scoped memory for tpu_custom_call.1']
    #allocation4 [shape = 's32[2]{0}', space=sflag, size = 0x8, scoped, tag = 'scoped memory for tpu_custom_call.1']
    #allocation5 [shape = 'u8[32768]{0}', space=vmem, size = 0x8000, scoped, tag = 'input window, operand 1']
    #allocation6 [shape = 's32[2]{0}', space=sflag, size = 0x8, scoped, tag = 'scoped memory for tpu_custom_call.1']
    #allocation7 [shape = 'u8[65536]{0}', space=vmem, size = 0x10000, scoped, tag = 'input window, operand 2, single buffered']
    #allocation8 [shape = 'u8[262144]{0}', space=vmem, size = 0x40000, scoped, tag = 'input window, operand 4, single buffered']
    #allocation9 [shape = 's32[1]{0}', space=sflag, size = 0x4, scoped, tag = 'scoped memory for tpu_custom_call.1']
    #allocation10 [shape = 'u8[65536]{0}', space=vmem, size = 0x10000, scoped, tag = 'output window, operand 0']
    #allocation11 [shape = 'u8[32768]{0}', space=vmem, size = 0x8000, scoped, tag = 'output window, operand 1']
    #allocation12 [shape = 's32[2]{0}', space=sflag, size = 0x8, scoped, tag = 'scoped memory for tpu_custom_call.1']
    %13 = vsyncpa [#allocation3], 0
    %s14 = scalar_lea.sflag [#allocation3], 1
    %15 = vsyncpa %s14, 0
    %16 = vsyncpa [#allocation6], 0
    %s17 = scalar_lea.sflag [#allocation6], 1
    %18 = vsyncpa %s17, 0
    %19 = vsyncpa [#allocation9], 0
    %20 = vsyncpa [#allocation4], 0
    %s21 = scalar_lea.sflag [#allocation4], 1
    %22 = vsyncpa %s21, 0
    %23 = vsyncpa [#allocation12], 0
    %s24 = scalar_lea.sflag [#allocation12], 1
    %25 = vsyncpa %s24, 0
    loop: start=0, step=1, limit=4
    $region2: #{tpu_custom_call.1} parent=1 // loop_pre_header
      _
    $region3: #{tpu_custom_call.1} parent=1 // loop_header
      %s27 = sphi 0, %s31
      %p28 = scmp.ge.s32.totalorder %s27, 4
      %s37 = sphi 0, %s39
      %s40 = sphi 0, %s37
      %s41 = sphi 0, %s40
      %s57 = sphi 0, %s41
      %s63 = sphi 0, %s65
      %s66 = sphi 0, %s63
      %s67 = sphi 0, %s66
      %s83 = sphi 0, %s67
      %s87 = sphi 0, %s87
      %s89 = sphi 0, %s87
      %s90 = sphi 0, %s89
      %s104 = sphi 0, %s90
      %s108 = sphi 0, %s108
      %s110 = sphi 0, %s108
      %s111 = sphi 0, %s110
      %s125 = sphi 0, %s111
      %s129 = sphi 0, %s129
      %s131 = sphi 0, %s129
      %s132 = sphi 0, %s131
      %s146 = sphi 0, %s132
      %s150 = sphi 0, %s150
      %s152 = sphi 0, %s150
      %s153 = sphi 0, %s152
      %s167 = sphi 0, %s153
      %s173 = sphi 0, %s175
      %s176 = sphi 0, %s173
      %s177 = sphi 0, %s176
      %s193 = sphi 0, %s177
      %s199 = sphi 0, %s201
      %s202 = sphi 0, %s199
      %s203 = sphi 0, %s202
      %s219 = sphi 0, %s203
    $region4: #{tpu_custom_call.1} parent=1 // loop_header_branch
      %30 = sbr.rel (%p28) target = $region8
    $region5: #{tpu_custom_call.1} parent=1 // loop_body
      %s32 = ssub.s32 %s27, 1
      %s33 = ssub.s32 %s27, 2
      %s34 = sadd.s32 %s27, 1
      %s35 = ssub.s32 %s27, %s34
      %p36 = scmp.eq.s32.totalorder %s35, 0
      %s38 = sadd.s32 %s37, 1
      %s39 = scalar_select %p36, %s37, %s38
      %p42 = pneg %p36
      %p43 = scmp.eq.s32.totalorder %s27, 1
      %p44 = por %p42, %p43
      %p45 = scmp.ne.s32.totalorder %s37, %s40
      %p46 = scmp.eq.s32.totalorder %s27, 0
      %p47 = por %p45, %p46
      %p48 = scmp.ne.s32.totalorder %s37, %s40
      %p49 = scmp.eq.s32.totalorder %s32, 1
      %p50 = por %p48, %p49
      %p51 = scmp.ne.s32.totalorder %s40, %s41
      %p52 = scmp.eq.s32.totalorder %s32, 0
      %p53 = por %p51, %p52
      %p54 = scmp.ne.s32.totalorder %s40, %s41
      %p55 = scmp.eq.s32.totalorder %s33, 1
      %p56 = por %p54, %p55
      %p58 = scmp.ne.s32.totalorder %s41, %s57
      %p59 = scmp.eq.s32.totalorder %s33, 0
      %p60 = por %p58, %p59
      %s61 = ssub.s32 %s27, %s34
      %p62 = scmp.eq.s32.totalorder %s61, 0
      %s64 = sadd.s32 %s63, 1
      %s65 = scalar_select %p62, %s63, %s64
      %p68 = pneg %p62
      %p69 = scmp.eq.s32.totalorder %s27, 1
      %p70 = por %p68, %p69
      %p71 = scmp.ne.s32.totalorder %s63, %s66
      %p72 = scmp.eq.s32.totalorder %s27, 0
      %p73 = por %p71, %p72
      %p74 = scmp.ne.s32.totalorder %s63, %s66
      %p75 = scmp.eq.s32.totalorder %s32, 1
      %p76 = por %p74, %p75
      %p77 = scmp.ne.s32.totalorder %s66, %s67
      %p78 = scmp.eq.s32.totalorder %s32, 0
      %p79 = por %p77, %p78
      %p80 = scmp.ne.s32.totalorder %s66, %s67
      %p81 = scmp.eq.s32.totalorder %s33, 1
      %p82 = por %p80, %p81
      %p84 = scmp.ne.s32.totalorder %s67, %s83
      %p85 = scmp.eq.s32.totalorder %s33, 0
      %p86 = por %p84, %p85
      %s88 = sadd.s32 %s87, 1
      %p91 = scmp.eq.s32.totalorder %s27, 1
      %p92 = scmp.ne.s32.totalorder %s87, %s89
      %p93 = scmp.eq.s32.totalorder %s27, 0
      %p94 = por %p92, %p93
      %p95 = scmp.ne.s32.totalorder %s87, %s89
      %p96 = scmp.eq.s32.totalorder %s32, 1
      %p97 = por %p95, %p96
      %p98 = scmp.ne.s32.totalorder %s89, %s90
      %p99 = scmp.eq.s32.totalorder %s32, 0
      %p100 = por %p98, %p99
      %p101 = scmp.ne.s32.totalorder %s89, %s90
      %p102 = scmp.eq.s32.totalorder %s33, 1
      %p103 = por %p101, %p102
      %p105 = scmp.ne.s32.totalorder %s90, %s104
      %p106 = scmp.eq.s32.totalorder %s33, 0
      %p107 = por %p105, %p106
      %s109 = sadd.s32 %s108, 1
      %p112 = scmp.eq.s32.totalorder %s27, 1
      %p113 = scmp.ne.s32.totalorder %s108, %s110
      %p114 = scmp.eq.s32.totalorder %s27, 0
      %p115 = por %p113, %p114
      %p116 = scmp.ne.s32.totalorder %s108, %s110
      %p117 = scmp.eq.s32.totalorder %s32, 1
      %p118 = por %p116, %p117
      %p119 = scmp.ne.s32.totalorder %s110, %s111
      %p120 = scmp.eq.s32.totalorder %s32, 0
      %p121 = por %p119, %p120
      %p122 = scmp.ne.s32.totalorder %s110, %s111
      %p123 = scmp.eq.s32.totalorder %s33, 1
      %p124 = por %p122, %p123
      %p126 = scmp.ne.s32.totalorder %s111, %s125
      %p127 = scmp.eq.s32.totalorder %s33, 0
      %p128 = por %p126, %p127
      %s130 = sadd.s32 %s129, 1
      %p133 = scmp.eq.s32.totalorder %s27, 1
      %p134 = scmp.ne.s32.totalorder %s129, %s131
      %p135 = scmp.eq.s32.totalorder %s27, 0
      %p136 = por %p134, %p135
      %p137 = scmp.ne.s32.totalorder %s129, %s131
      %p138 = scmp.eq.s32.totalorder %s32, 1
      %p139 = por %p137, %p138
      %p140 = scmp.ne.s32.totalorder %s131, %s132
      %p141 = scmp.eq.s32.totalorder %s32, 0
      %p142 = por %p140, %p141
      %p143 = scmp.ne.s32.totalorder %s131, %s132
      %p144 = scmp.eq.s32.totalorder %s33, 1
      %p145 = por %p143, %p144
      %p147 = scmp.ne.s32.totalorder %s132, %s146
      %p148 = scmp.eq.s32.totalorder %s33, 0
      %p149 = por %p147, %p148
      %s151 = sadd.s32 %s150, 1
      %p154 = scmp.eq.s32.totalorder %s27, 1
      %p155 = scmp.ne.s32.totalorder %s150, %s152
      %p156 = scmp.eq.s32.totalorder %s27, 0
      %p157 = por %p155, %p156
      %p158 = scmp.ne.s32.totalorder %s150, %s152
      %p159 = scmp.eq.s32.totalorder %s32, 1
      %p160 = por %p158, %p159
      %p161 = scmp.ne.s32.totalorder %s152, %s153
      %p162 = scmp.eq.s32.totalorder %s32, 0
      %p163 = por %p161, %p162
      %p164 = scmp.ne.s32.totalorder %s152, %s153
      %p165 = scmp.eq.s32.totalorder %s33, 1
      %p166 = por %p164, %p165
      %p168 = scmp.ne.s32.totalorder %s153, %s167
      %p169 = scmp.eq.s32.totalorder %s33, 0
      %p170 = por %p168, %p169
      %s171 = ssub.s32 %s27, %s34
      %p172 = scmp.eq.s32.totalorder %s171, 0
      %s174 = sadd.s32 %s173, 1
      %s175 = scalar_select %p172, %s173, %s174
      %p178 = pneg %p172
      %p179 = scmp.eq.s32.totalorder %s27, 1
      %p180 = por %p178, %p179
      %p181 = scmp.ne.s32.totalorder %s173, %s176
      %p182 = scmp.eq.s32.totalorder %s27, 0
      %p183 = por %p181, %p182
      %p184 = scmp.ne.s32.totalorder %s173, %s176
      %p185 = scmp.eq.s32.totalorder %s32, 1
      %p186 = por %p184, %p185
      %p187 = scmp.ne.s32.totalorder %s176, %s177
      %p188 = scmp.eq.s32.totalorder %s32, 0
      %p189 = por %p187, %p188
      %p190 = scmp.ne.s32.totalorder %s176, %s177
      %p191 = scmp.eq.s32.totalorder %s33, 1
      %p192 = por %p190, %p191
      %p194 = scmp.ne.s32.totalorder %s177, %s193
      %p195 = scmp.eq.s32.totalorder %s33, 0
      %p196 = por %p194, %p195
      %s197 = ssub.s32 %s27, %s34
      %p198 = scmp.eq.s32.totalorder %s197, 0
      %s200 = sadd.s32 %s199, 1
      %s201 = scalar_select %p198, %s199, %s200
      %p204 = pneg %p198
      %p205 = scmp.eq.s32.totalorder %s27, 1
      %p206 = por %p204, %p205
      %p207 = scmp.ne.s32.totalorder %s199, %s202
      %p208 = scmp.eq.s32.totalorder %s27, 0
      %p209 = por %p207, %p208
      %p210 = scmp.ne.s32.totalorder %s199, %s202
      %p211 = scmp.eq.s32.totalorder %s32, 1
      %p212 = por %p210, %p211
      %p213 = scmp.ne.s32.totalorder %s202, %s203
      %p214 = scmp.eq.s32.totalorder %s32, 0
      %p215 = por %p213, %p214
      %p216 = scmp.ne.s32.totalorder %s202, %s203
      %p217 = scmp.eq.s32.totalorder %s33, 1
      %p218 = por %p216, %p217
      %p220 = scmp.ne.s32.totalorder %s203, %s219
      %p221 = scmp.eq.s32.totalorder %s33, 0
      %p222 = por %p220, %p221
      %p223 = scmp.le.s32.totalorder 1, %s27
      %p224 = scmp.lt.s32.totalorder %s27, 3
      %p225 = pnand %p223, %p224
      %p226 = pneg %p225
      // Predicated region
      $region9: #{tpu_custom_call.1} parent=5 // pred_check
        _
      $region10: #{tpu_custom_call.1} parent=5 // pred_check_branch
        %228 = sbr.rel (%p225) target = $region12
      $region11: #{tpu_custom_call.1} parent=5 // pred_region
        %s229 = ssub.s32 %s27, 1
        // Predicated region
        $region13: #{tpu_custom_call.1} parent=11 // pred_check
          %p230 = pneg %p100
        $region14: #{tpu_custom_call.1} parent=11 // pred_check_branch
          %232 = sbr.rel (%p230) target = $region16
        $region15: #{tpu_custom_call.1} parent=11 // pred_region
          %s234 = ssub.s32 2048, 2048
          %235 = vsyncadd [#allocation6], %s234
          %s236 = sshll.u32 [#allocation7], 4
          %s237 = int_to_ptr.vmem [resolvable:$true] %s236
          %242 = dma.hbm_to_vmem [thread:$0]  %s2, 2048, %s237, [#allocation6], 128, 128, 8
        $region16: #{tpu_custom_call.1} parent=11 // pred_fallthru
          _
        // Predicated region
        $region17: #{tpu_custom_call.1} parent=11 // pred_check
          %p243 = pneg %p121
        $region18: #{tpu_custom_call.1} parent=11 // pred_check_branch
          %245 = sbr.rel (%p243) target = $region20
        $region19: #{tpu_custom_call.1} parent=11 // pred_region
          _
        $region20: #{tpu_custom_call.1} parent=11 // pred_fallthru
          _
        // Predicated region
        $region21: #{tpu_custom_call.1} parent=11 // pred_check
          %p246 = pneg %p142
        $region22: #{tpu_custom_call.1} parent=11 // pred_check_branch
          %248 = sbr.rel (%p246) target = $region24
        $region23: #{tpu_custom_call.1} parent=11 // pred_region
          %s250 = ssub.s32 8192, 8192
          %251 = vsyncadd [#allocation9], %s250
          %s252 = sshll.u32 [#allocation8], 4
          %s253 = int_to_ptr.vmem [resolvable:$true] %s252
          %258 = dma.hbm_to_vmem [thread:$0]  %s4, 8192, %s253, [#allocation9], 256, 256, 16
        $region24: #{tpu_custom_call.1} parent=11 // pred_fallthru
          _
        // Predicated region
        $region25: #{tpu_custom_call.1} parent=11 // pred_check
          %p259 = pneg %p163
        $region26: #{tpu_custom_call.1} parent=11 // pred_check_branch
          %261 = sbr.rel (%p259) target = $region28
        $region27: #{tpu_custom_call.1} parent=11 // pred_region
          _
        $region28: #{tpu_custom_call.1} parent=11 // pred_fallthru
          _
      $region12: #{tpu_custom_call.1} parent=5 // pred_fallthru
        _
      %p262 = scmp.lt.s32.totalorder %s27, 2
      // Predicated region
      $region29: #{tpu_custom_call.1} parent=5 // pred_check
        %p263 = pneg %p262
      $region30: #{tpu_custom_call.1} parent=5 // pred_check_branch
        %265 = sbr.rel (%p263) target = $region32
      $region31: #{tpu_custom_call.1} parent=5 // pred_region
        // Predicated region
        $region33: #{tpu_custom_call.1} parent=31 // pred_check
          %p266 = pneg %p47
        $region34: #{tpu_custom_call.1} parent=31 // pred_check_branch
          %268 = sbr.rel (%p266) target = $region36
        $region35: #{tpu_custom_call.1} parent=31 // pred_region
          %s269 = sand.u32 %s37, 1
          %s270 = scalar_lea.sflag [#allocation3], %s269
          %s271 = sand.u32 %s37, 1
          %s272 = smul.addr %s271, 16
          %s273 = scalar_lea.vmem [#allocation2], %s272
          %s274 = smul.u32 2, %s27
          %s276 = ssub.s32 256, 256
          %277 = vsyncadd %s270, %s276
          %s278 = smul.addr %s274, 128
          %s279 = scalar_lea.hbm %s0, %s278
          %s280 = sshll.u32 %s273, 4
          %s281 = int_to_ptr.vmem [resolvable:$true] %s280
          %286 = dma.hbm_to_vmem [thread:$0]  %s279, 256, %s281, %s270, 128, 128, 8
        $region36: #{tpu_custom_call.1} parent=31 // pred_fallthru
          _
        // Predicated region
        $region37: #{tpu_custom_call.1} parent=31 // pred_check
          %p287 = pneg %p73
        $region38: #{tpu_custom_call.1} parent=31 // pred_check_branch
          %289 = sbr.rel (%p287) target = $region40
        $region39: #{tpu_custom_call.1} parent=31 // pred_region
          %s290 = sand.u32 %s27, 1
          %s291 = scalar_lea.sflag [#allocation6], %s290
          %s292 = sand.u32 %s63, 1
          %s293 = smul.addr %s292, 32
          %s294 = scalar_lea.vmem [#allocation5], %s293
          %s295 = smul.u32 2, %s27
          %s297 = ssub.s32 512, 512
          %298 = vsyncadd %s291, %s297
          %s299 = smul.addr %s295, 2
          %s300 = smul.addr %s299, 128
          %s301 = scalar_lea.hbm %s1, %s300
          %s302 = sshll.u32 %s294, 4
          %s303 = int_to_ptr.vmem [resolvable:$true] %s302
          %308 = dma.hbm_to_vmem [thread:$0]  %s301, 512, %s303, %s291, 256, 256, 16
        $region40: #{tpu_custom_call.1} parent=31 // pred_fallthru
          _
      $region32: #{tpu_custom_call.1} parent=5 // pred_fallthru
        _
      %p309 = scmp.le.s32.totalorder 1, %s27
      %p310 = scmp.lt.s32.totalorder %s27, 3
      %p311 = pnand %p309, %p310
      %p312 = pneg %p311
      // Predicated region
      $region41: #{tpu_custom_call.1} parent=5 // pred_check
        _
      $region42: #{tpu_custom_call.1} parent=5 // pred_check_branch
        %314 = sbr.rel (%p311) target = $region44
      $region43: #{tpu_custom_call.1} parent=5 // pred_region
        %s315 = ssub.s32 %s27, 1
        %s316 = sand.u32 %s40, 1
        %s317 = scalar_lea.sflag [#allocation3], %s316
        %s318 = sand.u32 %s40, 1
        %s319 = smul.addr %s318, 16
        %s320 = scalar_lea.vmem [#allocation2], %s319
        // Predicated region
        $region45: #{tpu_custom_call.1} parent=43 // pred_check
          %p321 = pneg %p53
        $region46: #{tpu_custom_call.1} parent=43 // pred_check_branch
          %323 = sbr.rel (%p321) target = $region48
        $region47: #{tpu_custom_call.1} parent=43 // pred_region
          %324 = dma.done %s317, 256
        $region48: #{tpu_custom_call.1} parent=43 // pred_fallthru
          _
        %s325 = sand.u32 %s32, 1
        %s326 = scalar_lea.sflag [#allocation6], %s325
        %s327 = sand.u32 %s66, 1
        %s328 = smul.addr %s327, 32
        %s329 = scalar_lea.vmem [#allocation5], %s328
        // Predicated region
        $region49: #{tpu_custom_call.1} parent=43 // pred_check
          %p330 = pneg %p79
        $region50: #{tpu_custom_call.1} parent=43 // pred_check_branch
          %332 = sbr.rel (%p330) target = $region52
        $region51: #{tpu_custom_call.1} parent=43 // pred_region
          %333 = dma.done %s326, 512
        $region52: #{tpu_custom_call.1} parent=43 // pred_fallthru
          _
        // Predicated region
        $region53: #{tpu_custom_call.1} parent=43 // pred_check
          %p334 = pneg %p100
        $region54: #{tpu_custom_call.1} parent=43 // pred_check_branch
          %336 = sbr.rel (%p334) target = $region56
        $region55: #{tpu_custom_call.1} parent=43 // pred_region
          %337 = dma.done [#allocation6], 2048
        $region56: #{tpu_custom_call.1} parent=43 // pred_fallthru
          _
        // Predicated region
        $region57: #{tpu_custom_call.1} parent=43 // pred_check
          %p338 = pneg %p142
        $region58: #{tpu_custom_call.1} parent=43 // pred_check_branch
          %340 = sbr.rel (%p338) target = $region60
        $region59: #{tpu_custom_call.1} parent=43 // pred_region
          %341 = dma.done [#allocation9], 8192
        $region60: #{tpu_custom_call.1} parent=43 // pred_fallthru
          _
        %s342 = sand.u32 %s40, 1
        %s343 = scalar_lea.sflag [#allocation3], %s342
        %s344 = sand.u32 %s40, 1
        %s345 = smul.addr %s344, 16
        %s346 = scalar_lea.vmem [#allocation2], %s345
        %p347 = pneg %p53
        %p348 = pneg %p50
        %s349 = sand.u32 %s32, 1
        %s350 = scalar_lea.sflag [#allocation6], %s349
        %s351 = sand.u32 %s66, 1
        %s352 = smul.addr %s351, 32
        %s353 = scalar_lea.vmem [#allocation5], %s352
        %p354 = pneg %p79
        %p355 = pneg %p76
        %p356 = pneg %p100
        %p357 = pneg %p97
        %p358 = pneg %p121
        %p359 = pneg %p118
        %p360 = pneg %p142
        %p361 = pneg %p139
        %p362 = pneg %p163
        %p363 = pneg %p160
        %p364 = pneg %p189
        %p365 = pneg %p186
        %s366 = sand.u32 %s176, 1
        %s367 = scalar_lea.sflag [#allocation4], %s366
        %s368 = sand.u32 %s176, 1
        %s369 = smul.addr %s368, 64
        %s370 = scalar_lea.vmem [#allocation10], %s369
        %p371 = pneg %p215
        %p372 = pneg %p212
        %s373 = sand.u32 %s202, 1
        %s374 = scalar_lea.sflag [#allocation12], %s373
        %s375 = sand.u32 %s202, 1
        %s376 = smul.addr %s375, 32
        %s377 = scalar_lea.vmem [#allocation11], %s376
        %s378 = smul.u32 2, %s32
        %s379 = smul.u32 2, %s32
        %s380 = smul.u32 2, %s32
        %s381 = smul.u32 2, %s32
        %v383 = vld [vmem:[%s320] sm:$0xff]
        %v384 = vld [vmem:[%s320 + $0x8] sm:$0xff]
        %v385 = vpack.c.bf16 %v384, %v383
        %v386 = vld [vmem:[#allocation7] sm:$0xff]
        %v387 = vld [vmem:[#allocation7 + $0x8] sm:$0xff]
        %v388 = vld [vmem:[#allocation7 + $0x10] sm:$0xff]
        %v389 = vld [vmem:[#allocation7 + $0x18] sm:$0xff]
        %v390 = vld [vmem:[#allocation7 + $0x20] sm:$0xff]
        %v391 = vld [vmem:[#allocation7 + $0x28] sm:$0xff]
        %v392 = vld [vmem:[#allocation7 + $0x30] sm:$0xff]
        %v393 = vld [vmem:[#allocation7 + $0x38] sm:$0xff]
        %v394 = vld [vmem:[#allocation7 + $0x40] sm:$0xff]
        %v395 = vld [vmem:[#allocation7 + $0x48] sm:$0xff]
        %v396 = vld [vmem:[#allocation7 + $0x50] sm:$0xff]
        %v397 = vld [vmem:[#allocation7 + $0x58] sm:$0xff]
        %v398 = vld [vmem:[#allocation7 + $0x60] sm:$0xff]
        %v399 = vld [vmem:[#allocation7 + $0x68] sm:$0xff]
        %v400 = vld [vmem:[#allocation7 + $0x70] sm:$0xff]
        %v401 = vld [vmem:[#allocation7 + $0x78] sm:$0xff]
        %v402 = vld [vmem:[%s3] sm:$0x3]
        %v404 = vlaneseq
        %v405 = vshrl.u32 %v404, 7
        %v406 = vsub.s32 0, %v405
        %v407 = vrot.slane %v402, %v406
        %v408 = vlaneseq
        %v409 = vshrl.u32 %v408, 7
        %v410 = vsub.s32 1, %v409
        %v411 = vrot.slane %v402, %v410
        %v430 = vunpack.c.l.b16 %v386
        %v431 = vunpack.c.h.b16 %v386
        %v432 = vunpack.c.l.b16 %v387
        %v433 = vunpack.c.h.b16 %v387
        %v434 = vunpack.c.l.b16 %v388
        %v435 = vunpack.c.h.b16 %v388
        %v436 = vunpack.c.l.b16 %v389
        %v437 = vunpack.c.h.b16 %v389
        %v438 = vunpack.c.l.b16 %v390
        %v439 = vunpack.c.h.b16 %v390
        %v440 = vunpack.c.l.b16 %v391
        %v441 = vunpack.c.h.b16 %v391
        %v442 = vunpack.c.l.b16 %v392
        %v443 = vunpack.c.h.b16 %v392
        %v444 = vunpack.c.l.b16 %v393
        %v445 = vunpack.c.h.b16 %v393
        %v446 = vunpack.c.l.b16 %v394
        %v447 = vunpack.c.h.b16 %v394
        %v448 = vunpack.c.l.b16 %v395
        %v449 = vunpack.c.h.b16 %v395
        %v450 = vunpack.c.l.b16 %v396
        %v451 = vunpack.c.h.b16 %v396
        %v452 = vunpack.c.l.b16 %v397
        %v453 = vunpack.c.h.b16 %v397
        %v454 = vunpack.c.l.b16 %v398
        %v455 = vunpack.c.h.b16 %v398
        %v456 = vunpack.c.l.b16 %v399
        %v457 = vunpack.c.h.b16 %v399
        %v458 = vunpack.c.l.b16 %v400
        %v459 = vunpack.c.h.b16 %v400
        %v460 = vunpack.c.l.b16 %v401
        %v461 = vunpack.c.h.b16 %v401
        %v462 = vpack.c.b16 %v432, %v430
        %v463 = vpack.c.b16 %v433, %v431
        %v464 = vpack.c.b16 %v436, %v434
        %v465 = vpack.c.b16 %v437, %v435
        %v466 = vpack.c.b16 %v440, %v438
        %v467 = vpack.c.b16 %v441, %v439
        %v468 = vpack.c.b16 %v444, %v442
        %v469 = vpack.c.b16 %v445, %v443
        %v470 = vpack.c.b16 %v448, %v446
        %v471 = vpack.c.b16 %v449, %v447
        %v472 = vpack.c.b16 %v452, %v450
        %v473 = vpack.c.b16 %v453, %v451
        %v474 = vpack.c.b16 %v456, %v454
        %v475 = vpack.c.b16 %v457, %v455
        %v476 = vpack.c.b16 %v460, %v458
        %v477 = vpack.c.b16 %v461, %v459
        %494 = vmatprep.subr.bf16.mxu0 %v463
        %495 = vmatpush1.bf16.msra.mxu0 %v462
        %496 = vmatprep.subr.bf16.mxu0 %v465
        %497 = vmatpush1.bf16.msra.mxu0 %v464
        %498 = vmatprep.subr.bf16.mxu0 %v467
        %499 = vmatpush1.bf16.msra.mxu0 %v466
        %500 = vmatprep.subr.bf16.mxu0 %v469
        %501 = vmatpush1.bf16.msra.mxu0 %v468
        %502 = vmatprep.subr.bf16.mxu0 %v471
        %503 = vmatpush1.bf16.msra.mxu0 %v470
        %504 = vmatprep.subr.bf16.mxu0 %v473
        %505 = vmatpush1.bf16.msra.mxu0 %v472
        %506 = vmatprep.subr.bf16.mxu0 %v475
        %507 = vmatpush1.bf16.msra.mxu0 %v474
        %508 = vmatprep.subr.bf16.mxu0 %v477
        %509 = vmatpush1.bf16.msra.mxu0 %v476
        %510 = vmatprep.subr.bf16.mxu0 0
        %511 = vmatpush1.bf16.msra.mxu0 0
        %512 = vmatprep.subr.bf16.mxu0 0
        %513 = vmatpush1.bf16.msra.mxu0 0
        %514 = vmatprep.subr.bf16.mxu0 0
        %515 = vmatpush1.bf16.msra.mxu0 0
        %516 = vmatprep.subr.bf16.mxu0 0
        %517 = vmatpush1.bf16.msra.mxu0 0
        %518 = vmatprep.subr.bf16.mxu0 0
        %519 = vmatpush1.bf16.msra.mxu0 0
        %520 = vmatprep.subr.bf16.mxu0 0
        %521 = vmatpush1.bf16.msra.mxu0 0
        %522 = vmatprep.subr.bf16.mxu0 0
        %523 = vmatpush1.bf16.msra.mxu0 0
        %524 = vmatprep.subr.bf16.mxu0 0
        %525 = vmatpush1.bf16.msra.mxu0 0
        %526 = vmatprep.mubr.bf16.mxu0 0
        %527 = vmatmul.mubr.bf16.gmra.mrb[0].mxu0 %v385
        %v528 = vpop.f32.mrb[0].mxu0
        %v529 = vadd.f32 %v407, %v528
        %v530 = vpop.f32.mrb[0].mxu0
        %v531 = vadd.f32 %v411, %v530
        %v532 = vpop.f32.mrb[0].mxu0
        %v533 = vadd.f32 %v407, %v532
        %v534 = vpop.f32.mrb[0].mxu0
        %v535 = vadd.f32 %v411, %v534
        %536 = vdwg.mxu0
        %v537 = vmax.f32 %v529, 0.0
        %v538 = vmax.f32 %v531, 0.0
        %v539 = vmax.f32 %v533, 0.0
        %v540 = vmax.f32 %v535, 0.0
        %v541 = vld [vmem:[%s329] sm:$0xff]
        %v542 = vld [vmem:[%s329 + $0x8] sm:$0xff]
        %v543 = vld [vmem:[%s329 + $0x10] sm:$0xff]
        %v544 = vld [vmem:[%s329 + $0x18] sm:$0xff]
        %v545 = vadd.f32 %v541, %v537
        %v546 = vadd.f32 %v542, %v538
        %v547 = vadd.f32 %v543, %v539
        %v548 = vadd.f32 %v544, %v540
        %549 = vst [vmem:[%s377] sm:$0xff] %v545
        %550 = vst [vmem:[%s377 + $0x8] sm:$0xff] %v546
        %551 = vst [vmem:[%s377 + $0x10] sm:$0xff] %v547
        %552 = vst [vmem:[%s377 + $0x18] sm:$0xff] %v548
        %v553 = vpack.c.bf16 %v547, %v545
        %v554 = vpack.c.bf16 %v548, %v546
        %v555 = vld [vmem:[#allocation8] sm:$0xff]
        %v556 = vld [vmem:[#allocation8 + $0x8] sm:$0xff]
        %v557 = vld [vmem:[#allocation8 + $0x10] sm:$0xff]
        %v558 = vld [vmem:[#allocation8 + $0x18] sm:$0xff]
        %v559 = vld [vmem:[#allocation8 + $0x20] sm:$0xff]
        %v560 = vld [vmem:[#allocation8 + $0x28] sm:$0xff]
        %v561 = vld [vmem:[#allocation8 + $0x30] sm:$0xff]
        %v562 = vld [vmem:[#allocation8 + $0x38] sm:$0xff]
        %v563 = vld [vmem:[#allocation8 + $0x40] sm:$0xff]
        %v564 = vld [vmem:[#allocation8 + $0x48] sm:$0xff]
        %v565 = vld [vmem:[#allocation8 + $0x50] sm:$0xff]
        %v566 = vld [vmem:[#allocation8 + $0x58] sm:$0xff]
        %v567 = vld [vmem:[#allocation8 + $0x60] sm:$0xff]
        %v568 = vld [vmem:[#allocation8 + $0x68] sm:$0xff]
        %v569 = vld [vmem:[#allocation8 + $0x70] sm:$0xff]
        %v570 = vld [vmem:[#allocation8 + $0x78] sm:$0xff]
        %v571 = vld [vmem:[#allocation8 + $0x80] sm:$0xff]
        %v572 = vld [vmem:[#allocation8 + $0x88] sm:$0xff]
        %v573 = vld [vmem:[#allocation8 + $0x90] sm:$0xff]
        %v574 = vld [vmem:[#allocation8 + $0x98] sm:$0xff]
        %v575 = vld [vmem:[#allocation8 + $0xa0] sm:$0xff]
        %v576 = vld [vmem:[#allocation8 + $0xa8] sm:$0xff]
        %v577 = vld [vmem:[#allocation8 + $0xb0] sm:$0xff]
        %v578 = vld [vmem:[#allocation8 + $0xb8] sm:$0xff]
        %v579 = vld [vmem:[#allocation8 + $0xc0] sm:$0xff]
        %v580 = vld [vmem:[#allocation8 + $0xc8] sm:$0xff]
        %v581 = vld [vmem:[#allocation8 + $0xd0] sm:$0xff]
        %v582 = vld [vmem:[#allocation8 + $0xd8] sm:$0xff]
        %v583 = vld [vmem:[#allocation8 + $0xe0] sm:$0xff]
        %v584 = vld [vmem:[#allocation8 + $0xe8] sm:$0xff]
        %v585 = vld [vmem:[#allocation8 + $0xf0] sm:$0xff]
        %v586 = vld [vmem:[#allocation8 + $0xf8] sm:$0xff]
        %v587 = vld [vmem:[#allocation8 + $0x100] sm:$0xff]
        %v588 = vld [vmem:[#allocation8 + $0x108] sm:$0xff]
        %v589 = vld [vmem:[#allocation8 + $0x110] sm:$0xff]
        %v590 = vld [vmem:[#allocation8 + $0x118] sm:$0xff]
        %v591 = vld [vmem:[#allocation8 + $0x120] sm:$0xff]
        %v592 = vld [vmem:[#allocation8 + $0x128] sm:$0xff]
        %v593 = vld [vmem:[#allocation8 + $0x130] sm:$0xff]
        %v594 = vld [vmem:[#allocation8 + $0x138] sm:$0xff]
        %v595 = vld [vmem:[#allocation8 + $0x140] sm:$0xff]
        %v596 = vld [vmem:[#allocation8 + $0x148] sm:$0xff]
        %v597 = vld [vmem:[#allocation8 + $0x150] sm:$0xff]
        %v598 = vld [vmem:[#allocation8 + $0x158] sm:$0xff]
        %v599 = vld [vmem:[#allocation8 + $0x160] sm:$0xff]
        %v600 = vld [vmem:[#allocation8 + $0x168] sm:$0xff]
        %v601 = vld [vmem:[#allocation8 + $0x170] sm:$0xff]
        %v602 = vld [vmem:[#allocation8 + $0x178] sm:$0xff]
        %v603 = vld [vmem:[#allocation8 + $0x180] sm:$0xff]
        %v604 = vld [vmem:[#allocation8 + $0x188] sm:$0xff]
        %v605 = vld [vmem:[#allocation8 + $0x190] sm:$0xff]
        %v606 = vld [vmem:[#allocation8 + $0x198] sm:$0xff]
        %v607 = vld [vmem:[#allocation8 + $0x1a0] sm:$0xff]
        %v608 = vld [vmem:[#allocation8 + $0x1a8] sm:$0xff]
        %v609 = vld [vmem:[#allocation8 + $0x1b0] sm:$0xff]
        %v610 = vld [vmem:[#allocation8 + $0x1b8] sm:$0xff]
        %v611 = vld [vmem:[#allocation8 + $0x1c0] sm:$0xff]
        %v612 = vld [vmem:[#allocation8 + $0x1c8] sm:$0xff]
        %v613 = vld [vmem:[#allocation8 + $0x1d0] sm:$0xff]
        %v614 = vld [vmem:[#allocation8 + $0x1d8] sm:$0xff]
        %v615 = vld [vmem:[#allocation8 + $0x1e0] sm:$0xff]
        %v616 = vld [vmem:[#allocation8 + $0x1e8] sm:$0xff]
        %v617 = vld [vmem:[#allocation8 + $0x1f0] sm:$0xff]
        %v618 = vld [vmem:[#allocation8 + $0x1f8] sm:$0xff]
        %v619 = vld [vmem:[%s5] sm:$0xf]
        %v621 = vlaneseq
        %v622 = vshrl.u32 %v621, 7
        %v623 = vsub.s32 0, %v622
        %v624 = vrot.slane %v619, %v623
        %v625 = vlaneseq
        %v626 = vshrl.u32 %v625, 7
        %v627 = vsub.s32 1, %v626
        %v628 = vrot.slane %v619, %v627
        %v629 = vlaneseq
        %v630 = vshrl.u32 %v629, 7
        %v631 = vsub.s32 2, %v630
        %v632 = vrot.slane %v619, %v631
        %v633 = vlaneseq
        %v634 = vshrl.u32 %v633, 7
        %v635 = vsub.s32 3, %v634
        %v636 = vrot.slane %v619, %v635
        %v705 = vunpack.c.l.b16 %v555
        %v706 = vunpack.c.h.b16 %v555
        %v707 = vunpack.c.l.b16 %v556
        %v708 = vunpack.c.h.b16 %v556
        %v709 = vunpack.c.l.b16 %v557
        %v710 = vunpack.c.h.b16 %v557
        %v711 = vunpack.c.l.b16 %v558
        %v712 = vunpack.c.h.b16 %v558
        %v713 = vunpack.c.l.b16 %v559
        %v714 = vunpack.c.h.b16 %v559
        %v715 = vunpack.c.l.b16 %v560
        %v716 = vunpack.c.h.b16 %v560
        %v717 = vunpack.c.l.b16 %v561
        %v718 = vunpack.c.h.b16 %v561
        %v719 = vunpack.c.l.b16 %v562
        %v720 = vunpack.c.h.b16 %v562
        %v721 = vunpack.c.l.b16 %v563
        %v722 = vunpack.c.h.b16 %v563
        %v723 = vunpack.c.l.b16 %v564
        %v724 = vunpack.c.h.b16 %v564
        %v725 = vunpack.c.l.b16 %v565
        %v726 = vunpack.c.h.b16 %v565
        %v727 = vunpack.c.l.b16 %v566
        %v728 = vunpack.c.h.b16 %v566
        %v729 = vunpack.c.l.b16 %v567
        %v730 = vunpack.c.h.b16 %v567
        %v731 = vunpack.c.l.b16 %v568
        %v732 = vunpack.c.h.b16 %v568
        %v733 = vunpack.c.l.b16 %v569
        %v734 = vunpack.c.h.b16 %v569
        %v735 = vunpack.c.l.b16 %v570
        %v736 = vunpack.c.h.b16 %v570
        %v737 = vunpack.c.l.b16 %v571
        %v738 = vunpack.c.h.b16 %v571
        %v739 = vunpack.c.l.b16 %v572
        %v740 = vunpack.c.h.b16 %v572
        %v741 = vunpack.c.l.b16 %v573
        %v742 = vunpack.c.h.b16 %v573
        %v743 = vunpack.c.l.b16 %v574
        %v744 = vunpack.c.h.b16 %v574
        %v745 = vunpack.c.l.b16 %v575
        %v746 = vunpack.c.h.b16 %v575
        %v747 = vunpack.c.l.b16 %v576
        %v748 = vunpack.c.h.b16 %v576
        %v749 = vunpack.c.l.b16 %v577
        %v750 = vunpack.c.h.b16 %v577
        %v751 = vunpack.c.l.b16 %v578
        %v752 = vunpack.c.h.b16 %v578
        %v753 = vunpack.c.l.b16 %v579
        %v754 = vunpack.c.h.b16 %v579
        %v755 = vunpack.c.l.b16 %v580
        %v756 = vunpack.c.h.b16 %v580
        %v757 = vunpack.c.l.b16 %v581
        %v758 = vunpack.c.h.b16 %v581
        %v759 = vunpack.c.l.b16 %v582
        %v760 = vunpack.c.h.b16 %v582
        %v761 = vunpack.c.l.b16 %v583
        %v762 = vunpack.c.h.b16 %v583
        %v763 = vunpack.c.l.b16 %v584
        %v764 = vunpack.c.h.b16 %v584
        %v765 = vunpack.c.l.b16 %v585
        %v766 = vunpack.c.h.b16 %v585
        %v767 = vunpack.c.l.b16 %v586
        %v768 = vunpack.c.h.b16 %v586
        %v769 = vunpack.c.l.b16 %v587
        %v770 = vunpack.c.h.b16 %v587
        %v771 = vunpack.c.l.b16 %v588
        %v772 = vunpack.c.h.b16 %v588
        %v773 = vunpack.c.l.b16 %v589
        %v774 = vunpack.c.h.b16 %v589
        %v775 = vunpack.c.l.b16 %v590
        %v776 = vunpack.c.h.b16 %v590
        %v777 = vunpack.c.l.b16 %v591
        %v778 = vunpack.c.h.b16 %v591
        %v779 = vunpack.c.l.b16 %v592
        %v780 = vunpack.c.h.b16 %v592
        %v781 = vunpack.c.l.b16 %v593
        %v782 = vunpack.c.h.b16 %v593
        %v783 = vunpack.c.l.b16 %v594
        %v784 = vunpack.c.h.b16 %v594
        %v785 = vunpack.c.l.b16 %v595
        %v786 = vunpack.c.h.b16 %v595
        %v787 = vunpack.c.l.b16 %v596
        %v788 = vunpack.c.h.b16 %v596
        %v789 = vunpack.c.l.b16 %v597
        %v790 = vunpack.c.h.b16 %v597
        %v791 = vunpack.c.l.b16 %v598
        %v792 = vunpack.c.h.b16 %v598
        %v793 = vunpack.c.l.b16 %v599
        %v794 = vunpack.c.h.b16 %v599
        %v795 = vunpack.c.l.b16 %v600
        %v796 = vunpack.c.h.b16 %v600
        %v797 = vunpack.c.l.b16 %v601
        %v798 = vunpack.c.h.b16 %v601
        %v799 = vunpack.c.l.b16 %v602
        %v800 = vunpack.c.h.b16 %v602
        %v801 = vunpack.c.l.b16 %v603
        %v802 = vunpack.c.h.b16 %v603
        %v803 = vunpack.c.l.b16 %v604
        %v804 = vunpack.c.h.b16 %v604
        %v805 = vunpack.c.l.b16 %v605
        %v806 = vunpack.c.h.b16 %v605
        %v807 = vunpack.c.l.b16 %v606
        %v808 = vunpack.c.h.b16 %v606
        %v809 = vunpack.c.l.b16 %v607
        %v810 = vunpack.c.h.b16 %v607
        %v811 = vunpack.c.l.b16 %v608
        %v812 = vunpack.c.h.b16 %v608
        %v813 = vunpack.c.l.b16 %v609
        %v814 = vunpack.c.h.b16 %v609
        %v815 = vunpack.c.l.b16 %v610
        %v816 = vunpack.c.h.b16 %v610
        %v817 = vunpack.c.l.b16 %v611
        %v818 = vunpack.c.h.b16 %v611
        %v819 = vunpack.c.l.b16 %v612
        %v820 = vunpack.c.h.b16 %v612
        %v821 = vunpack.c.l.b16 %v613
        %v822 = vunpack.c.h.b16 %v613
        %v823 = vunpack.c.l.b16 %v614
        %v824 = vunpack.c.h.b16 %v614
        %v825 = vunpack.c.l.b16 %v615
        %v826 = vunpack.c.h.b16 %v615
        %v827 = vunpack.c.l.b16 %v616
        %v828 = vunpack.c.h.b16 %v616
        %v829 = vunpack.c.l.b16 %v617
        %v830 = vunpack.c.h.b16 %v617
        %v831 = vunpack.c.l.b16 %v618
        %v832 = vunpack.c.h.b16 %v618
        %v833 = vpack.c.b16 %v709, %v705
        %v834 = vpack.c.b16 %v710, %v706
        %v835 = vpack.c.b16 %v711, %v707
        %v836 = vpack.c.b16 %v712, %v708
        %v837 = vpack.c.b16 %v717, %v713
        %v838 = vpack.c.b16 %v718, %v714
        %v839 = vpack.c.b16 %v719, %v715
        %v840 = vpack.c.b16 %v720, %v716
        %v841 = vpack.c.b16 %v725, %v721
        %v842 = vpack.c.b16 %v726, %v722
        %v843 = vpack.c.b16 %v727, %v723
        %v844 = vpack.c.b16 %v728, %v724
        %v845 = vpack.c.b16 %v733, %v729
        %v846 = vpack.c.b16 %v734, %v730
        %v847 = vpack.c.b16 %v735, %v731
        %v848 = vpack.c.b16 %v736, %v732
        %v849 = vpack.c.b16 %v741, %v737
        %v850 = vpack.c.b16 %v742, %v738
        %v851 = vpack.c.b16 %v743, %v739
        %v852 = vpack.c.b16 %v744, %v740
        %v853 = vpack.c.b16 %v749, %v745
        %v854 = vpack.c.b16 %v750, %v746
        %v855 = vpack.c.b16 %v751, %v747
        %v856 = vpack.c.b16 %v752, %v748
        %v857 = vpack.c.b16 %v757, %v753
        %v858 = vpack.c.b16 %v758, %v754
        %v859 = vpack.c.b16 %v759, %v755
        %v860 = vpack.c.b16 %v760, %v756
        %v861 = vpack.c.b16 %v765, %v761
        %v862 = vpack.c.b16 %v766, %v762
        %v863 = vpack.c.b16 %v767, %v763
        %v864 = vpack.c.b16 %v768, %v764
        %v865 = vpack.c.b16 %v773, %v769
        %v866 = vpack.c.b16 %v774, %v770
        %v867 = vpack.c.b16 %v775, %v771
        %v868 = vpack.c.b16 %v776, %v772
        %v869 = vpack.c.b16 %v781, %v777
        %v870 = vpack.c.b16 %v782, %v778
        %v871 = vpack.c.b16 %v783, %v779
        %v872 = vpack.c.b16 %v784, %v780
        %v873 = vpack.c.b16 %v789, %v785
        %v874 = vpack.c.b16 %v790, %v786
        %v875 = vpack.c.b16 %v791, %v787
        %v876 = vpack.c.b16 %v792, %v788
        %v877 = vpack.c.b16 %v797, %v793
        %v878 = vpack.c.b16 %v798, %v794
        %v879 = vpack.c.b16 %v799, %v795
        %v880 = vpack.c.b16 %v800, %v796
        %v881 = vpack.c.b16 %v805, %v801
        %v882 = vpack.c.b16 %v806, %v802
        %v883 = vpack.c.b16 %v807, %v803
        %v884 = vpack.c.b16 %v808, %v804
        %v885 = vpack.c.b16 %v813, %v809
        %v886 = vpack.c.b16 %v814, %v810
        %v887 = vpack.c.b16 %v815, %v811
        %v888 = vpack.c.b16 %v816, %v812
        %v889 = vpack.c.b16 %v821, %v817
        %v890 = vpack.c.b16 %v822, %v818
        %v891 = vpack.c.b16 %v823, %v819
        %v892 = vpack.c.b16 %v824, %v820
        %v893 = vpack.c.b16 %v829, %v825
        %v894 = vpack.c.b16 %v830, %v826
        %v895 = vpack.c.b16 %v831, %v827
        %v896 = vpack.c.b16 %v832, %v828
        %961 = vmatprep.subr.bf16.mxu0 %v834
        %962 = vmatpush1.bf16.msra.mxu0 %v833
        %963 = vmatprep.subr.bf16.mxu0 %v838
        %964 = vmatpush1.bf16.msra.mxu0 %v837
        %965 = vmatprep.subr.bf16.mxu0 %v842
        %966 = vmatpush1.bf16.msra.mxu0 %v841
        %967 = vmatprep.subr.bf16.mxu0 %v846
        %968 = vmatpush1.bf16.msra.mxu0 %v845
        %969 = vmatprep.subr.bf16.mxu0 %v850
        %970 = vmatpush1.bf16.msra.mxu0 %v849
        %971 = vmatprep.subr.bf16.mxu0 %v854
        %972 = vmatpush1.bf16.msra.mxu0 %v853
        %973 = vmatprep.subr.bf16.mxu0 %v858
        %974 = vmatpush1.bf16.msra.mxu0 %v857
        %975 = vmatprep.subr.bf16.mxu0 %v862
        %976 = vmatpush1.bf16.msra.mxu0 %v861
        %977 = vmatprep.subr.bf16.mxu0 %v866
        %978 = vmatpush1.bf16.msra.mxu0 %v865
        %979 = vmatprep.subr.bf16.mxu0 %v870
        %980 = vmatpush1.bf16.msra.mxu0 %v869
        %981 = vmatprep.subr.bf16.mxu0 %v874
        %982 = vmatpush1.bf16.msra.mxu0 %v873
        %983 = vmatprep.subr.bf16.mxu0 %v878
        %984 = vmatpush1.bf16.msra.mxu0 %v877
        %985 = vmatprep.subr.bf16.mxu0 %v882
        %986 = vmatpush1.bf16.msra.mxu0 %v881
        %987 = vmatprep.subr.bf16.mxu0 %v886
        %988 = vmatpush1.bf16.msra.mxu0 %v885
        %989 = vmatprep.subr.bf16.mxu0 %v890
        %990 = vmatpush1.bf16.msra.mxu0 %v889
        %991 = vmatprep.subr.bf16.mxu0 %v894
        %992 = vmatpush1.bf16.msra.mxu0 %v893
        %993 = vmatprep.mubr.bf16.mxu0 %v554
        %994 = vmatmul.mubr.bf16.gmra.mrb[0].mxu0 %v553
        %v995 = vpop.f32.mrb[0].mxu0
        %v996 = vadd.f32 %v624, %v995
        %v997 = vpop.f32.mrb[0].mxu0
        %v998 = vadd.f32 %v628, %v997
        %v999 = vpop.f32.mrb[0].mxu0
        %v1000 = vadd.f32 %v624, %v999
        %v1001 = vpop.f32.mrb[0].mxu0
        %v1002 = vadd.f32 %v628, %v1001
        %1003 = vdwg.mxu0
        %1004 = vmatprep.subr.bf16.mxu0 %v836
        %1005 = vmatpush1.bf16.msra.mxu0 %v835
        %1006 = vmatprep.subr.bf16.mxu0 %v840
        %1007 = vmatpush1.bf16.msra.mxu0 %v839
        %1008 = vmatprep.subr.bf16.mxu0 %v844
        %1009 = vmatpush1.bf16.msra.mxu0 %v843
        %1010 = vmatprep.subr.bf16.mxu0 %v848
        %1011 = vmatpush1.bf16.msra.mxu0 %v847
        %1012 = vmatprep.subr.bf16.mxu0 %v852
        %1013 = vmatpush1.bf16.msra.mxu0 %v851
        %1014 = vmatprep.subr.bf16.mxu0 %v856
        %1015 = vmatpush1.bf16.msra.mxu0 %v855
        %1016 = vmatprep.subr.bf16.mxu0 %v860
        %1017 = vmatpush1.bf16.msra.mxu0 %v859
        %1018 = vmatprep.subr.bf16.mxu0 %v864
        %1019 = vmatpush1.bf16.msra.mxu0 %v863
        %1020 = vmatprep.subr.bf16.mxu0 %v868
        %1021 = vmatpush1.bf16.msra.mxu0 %v867
        %1022 = vmatprep.subr.bf16.mxu0 %v872
        %1023 = vmatpush1.bf16.msra.mxu0 %v871
        %1024 = vmatprep.subr.bf16.mxu0 %v876
        %1025 = vmatpush1.bf16.msra.mxu0 %v875
        %1026 = vmatprep.subr.bf16.mxu0 %v880
        %1027 = vmatpush1.bf16.msra.mxu0 %v879
        %1028 = vmatprep.subr.bf16.mxu0 %v884
        %1029 = vmatpush1.bf16.msra.mxu0 %v883
        %1030 = vmatprep.subr.bf16.mxu0 %v888
        %1031 = vmatpush1.bf16.msra.mxu0 %v887
        %1032 = vmatprep.subr.bf16.mxu0 %v892
        %1033 = vmatpush1.bf16.msra.mxu0 %v891
        %1034 = vmatprep.subr.bf16.mxu0 %v896
        %1035 = vmatpush1.bf16.msra.mxu0 %v895
        %1036 = vmatprep.mubr.bf16.mxu0 %v554
        %1037 = vmatmul.mubr.bf16.gmra.mrb[0].mxu0 %v553
        %v1038 = vpop.f32.mrb[0].mxu0
        %v1039 = vadd.f32 %v632, %v1038
        %v1040 = vpop.f32.mrb[0].mxu0
        %v1041 = vadd.f32 %v636, %v1040
        %v1042 = vpop.f32.mrb[0].mxu0
        %v1043 = vadd.f32 %v632, %v1042
        %v1044 = vpop.f32.mrb[0].mxu0
        %v1045 = vadd.f32 %v636, %v1044
        %1046 = vdwg.mxu0
        %v1047 = vmax.f32 %v996, 0.0
        %v1048 = vmax.f32 %v998, 0.0
        %v1049 = vmax.f32 %v1039, 0.0
        %v1050 = vmax.f32 %v1041, 0.0
        %v1051 = vmax.f32 %v1000, 0.0
        %v1052 = vmax.f32 %v1002, 0.0
        %v1053 = vmax.f32 %v1043, 0.0
        %v1054 = vmax.f32 %v1045, 0.0
        %1055 = vst [vmem:[%s370] sm:$0xff] %v1047
        %1056 = vst [vmem:[%s370 + $0x8] sm:$0xff] %v1048
        %1057 = vst [vmem:[%s370 + $0x10] sm:$0xff] %v1049
        %1058 = vst [vmem:[%s370 + $0x18] sm:$0xff] %v1050
        %1059 = vst [vmem:[%s370 + $0x20] sm:$0xff] %v1051
        %1060 = vst [vmem:[%s370 + $0x28] sm:$0xff] %v1052
        %1061 = vst [vmem:[%s370 + $0x30] sm:$0xff] %v1053
        %1062 = vst [vmem:[%s370 + $0x38] sm:$0xff] %v1054
        %s1063 = sand.u32 %s176, 1
        %s1064 = scalar_lea.sflag [#allocation4], %s1063
        %s1065 = sand.u32 %s176, 1
        %s1066 = smul.addr %s1065, 64
        %s1067 = scalar_lea.vmem [#allocation10], %s1066
        %s1068 = sand.u32 %s202, 1
        %s1069 = scalar_lea.sflag [#allocation12], %s1068
        %s1070 = sand.u32 %s202, 1
        %s1071 = smul.addr %s1070, 32
        %s1072 = scalar_lea.vmem [#allocation11], %s1071
        // Predicated region
        $region61: #{tpu_custom_call.1} parent=43 // pred_check
          %p1073 = pneg %p186
        $region62: #{tpu_custom_call.1} parent=43 // pred_check_branch
          %1075 = sbr.rel (%p1073) target = $region64
        $region63: #{tpu_custom_call.1} parent=43 // pred_region
          %s1076 = smul.u32 2, %s32
          %s1078 = ssub.s32 1024, 1024
          %1079 = vsyncadd %s1064, %s1078
          %s1080 = smul.addr %s1076, 4
          %s1081 = smul.addr %s1080, 128
          %s1082 = scalar_lea.hbm %s6, %s1081
          %s1083 = sshll.u32 %s1067, 4
          %s1084 = int_to_ptr.vmem [resolvable:$true] %s1083
          %1089 = dma.vmem_to_hbm [thread:$0]  %s1084, 1024, %s1082, %s1064, 512, 512, 32
        $region64: #{tpu_custom_call.1} parent=43 // pred_fallthru
          _
        // Predicated region
        $region65: #{tpu_custom_call.1} parent=43 // pred_check
          %p1090 = pneg %p212
        $region66: #{tpu_custom_call.1} parent=43 // pred_check_branch
          %1092 = sbr.rel (%p1090) target = $region68
        $region67: #{tpu_custom_call.1} parent=43 // pred_region
          %s1093 = smul.u32 2, %s32
          %s1095 = ssub.s32 512, 512
          %1096 = vsyncadd %s1069, %s1095
          %s1097 = smul.addr %s1093, 2
          %s1098 = smul.addr %s1097, 128
          %s1099 = scalar_lea.hbm %s7, %s1098
          %s1100 = sshll.u32 %s1072, 4
          %s1101 = int_to_ptr.vmem [resolvable:$true] %s1100
          %1106 = dma.vmem_to_hbm [thread:$0]  %s1101, 512, %s1099, %s1069, 256, 256, 16
        $region68: #{tpu_custom_call.1} parent=43 // pred_fallthru
          _
      $region44: #{tpu_custom_call.1} parent=5 // pred_fallthru
        _
      %p1107 = scmp.le.s32.totalorder 2, %s27
      // Predicated region
      $region69: #{tpu_custom_call.1} parent=5 // pred_check
        %p1108 = pneg %p1107
      $region70: #{tpu_custom_call.1} parent=5 // pred_check_branch
        %1110 = sbr.rel (%p1108) target = $region72
      $region71: #{tpu_custom_call.1} parent=5 // pred_region
        %s1111 = ssub.s32 %s27, 2
        // Predicated region
        $region73: #{tpu_custom_call.1} parent=71 // pred_check
          %p1112 = pneg %p192
        $region74: #{tpu_custom_call.1} parent=71 // pred_check_branch
          %1114 = sbr.rel (%p1112) target = $region76
        $region75: #{tpu_custom_call.1} parent=71 // pred_region
          %s1115 = sand.u32 %s177, 1
          %s1116 = scalar_lea.sflag [#allocation4], %s1115
          %s1117 = sand.u32 %s177, 1
          %s1118 = smul.addr %s1117, 64
          %s1119 = scalar_lea.vmem [#allocation10], %s1118
          %1120 = dma.done %s1116, 1024
        $region76: #{tpu_custom_call.1} parent=71 // pred_fallthru
          _
        // Predicated region
        $region77: #{tpu_custom_call.1} parent=71 // pred_check
          %p1121 = pneg %p218
        $region78: #{tpu_custom_call.1} parent=71 // pred_check_branch
          %1123 = sbr.rel (%p1121) target = $region80
        $region79: #{tpu_custom_call.1} parent=71 // pred_region
          %s1124 = sand.u32 %s203, 1
          %s1125 = scalar_lea.sflag [#allocation12], %s1124
          %s1126 = sand.u32 %s203, 1
          %s1127 = smul.addr %s1126, 32
          %s1128 = scalar_lea.vmem [#allocation11], %s1127
          %1129 = dma.done %s1125, 512
        $region80: #{tpu_custom_call.1} parent=71 // pred_fallthru
          _
      $region72: #{tpu_custom_call.1} parent=5 // pred_fallthru
        _
    $region6: #{tpu_custom_call.1} parent=1 // loop_footer
      %s31 = sadd.s32 1, %s27
    $region7: #{tpu_custom_call.1} parent=1 // loop_footer_branch
      %26 = sbr.rel target = $region3
    $region8: #{tpu_custom_call.1} parent=1 // loop_exit
      _
    %1130 = vsyncpa [#allocation3], 1
    %s1131 = scalar_lea.sflag [#allocation3], 1
    %1132 = vsyncpa %s1131, 1
    %1133 = vsyncpa [#allocation6], 1
    %s1134 = scalar_lea.sflag [#allocation6], 1
    %1135 = vsyncpa %s1134, 1
    %1136 = vsyncpa [#allocation9], 1
    %1137 = vsyncpa [#allocation4], 1
    %s1138 = scalar_lea.sflag [#allocation4], 1
    %1139 = vsyncpa %s1138, 1
    %1140 = vsyncpa [#allocation12], 1
    %s1141 = scalar_lea.sflag [#allocation12], 1
    %1142 = vsyncpa %s1141, 1

</llo_original>
